<compile_context>
chip_gen: v7x
topology: tpu7x:2x2x1
jax: 0.10.0
libtpu: 0.0.40
codegen_flags: <defaults>
</compile_context>

<pallas_src>
import functools

import jax
import jax.numpy as jnp
from jax import lax
from jax.experimental import pallas as pl
from jax.experimental.pallas import tpu as pltpu


def _vq_kernel(x_ref, cb_ref, cbt_ref, cb2h_ref, q_ref, idx_ref, sse_ref, *,
               hw_valid: int, mask_tail: bool):
    x = x_ref[...]             # (D, t)      positions on lanes
    cb = cb_ref[...]           # (K_pad, D)
    cbt = cbt_ref[...]         # (D, K_pad)
    cb2h = cb2h_ref[...]       # (K_pad, 1)  0.5*||e||^2 (+1e30 sentinel rows)
    k_pad = cb.shape[0]
    t = x.shape[1]

    # Surrogate distance 0.5*||e||^2 - x.e : argmin-equivalent to ||x-e||^2
    # (||x||^2 is constant across K; the factor 2 is folded into cb2h).
    xe = jnp.dot(cb, x, preferred_element_type=jnp.float32)        # (K_pad, t)
    dist = cb2h - xe

    # First-index argmin over the codebook (sublane) axis — torch.argmin semantics.
    iota_k = lax.broadcasted_iota(jnp.int32, (k_pad, t), 0)
    dmin = jnp.min(dist, axis=0, keepdims=True)                    # (1, t)
    idx = jnp.min(jnp.where(dist == dmin, iota_k, k_pad),
                  axis=0, keepdims=True)                           # (1, t) int32

    # Gather codebook rows with a one-hot matmul (MXU); result is already in
    # the lane-dense (D, t) output layout — no relayout before the store.
    # (For large K/D one could cast only the distance matmul to bf16; at tiny
    #  K=16/D=4 the kernel is HBM-bound, so keep everything f32.)
    onehot = (iota_k == idx).astype(jnp.float32)                   # (K_pad, t)
    quant = jnp.dot(cbt, onehot, preferred_element_type=jnp.float32)  # (D, t)

    q_ref[...] = quant.astype(q_ref.dtype)
    idx_ref[...] = idx.astype(jnp.int32)

    # Per-tile partial SSE; tail masking only on the last hw tile (review #7).
    diff = quant - x
    per_col = jnp.sum(diff * diff, axis=0, keepdims=True)          # (1, t)
    if mask_tail:
        last = pl.num_programs(1) - 1

        @pl.when(pl.program_id(1) == last)
        def _():
            col = lax.broadcasted_iota(jnp.int32, (1, t), 1) + last * t
            masked = jnp.where(col < hw_valid, per_col, 0.0)
            sse_ref[...] = jnp.full(sse_ref.shape, jnp.sum(masked), jnp.float32)

        @pl.when(pl.program_id(1) != last)
        def _():
            sse_ref[...] = jnp.full(sse_ref.shape, jnp.sum(per_col), jnp.float32)
    else:
        sse_ref[...] = jnp.full(sse_ref.shape, jnp.sum(per_col), jnp.float32)


def _round_up(a: int, b: int) -> int:
    return ((a + b - 1) // b) * b


def _vmem_capacity_bytes() -> int:
    """Generation-aware VMEM capacity (v5e/v6e: 128 MiB, v7x: 64 MiB)."""
    try:
        info = pltpu.get_tpu_info()
        cap = getattr(info, "vmem_capacity_bytes", None)
        if cap:
            return int(cap)
    except Exception:
        pass
    return 64 * 1024 * 1024  # conservative fallback (v7x per-TensorCore)


@functools.partial(jax.jit, static_argnames=("commitment_cost",))
def vector_quantizer(x_nchw, codebook, *, commitment_cost: float):
    """Forward pass of VectorQuantizer.

    Args:
      x_nchw:   (N, C, H, W) float32 input (C == embedding_dim).
      codebook: (K, C) float32 codebook weights.
    Returns:
      quantized (N, C, H, W), commitment_loss (scalar), encoding_indices (N*H*W,)
    """
    N, C, H, W = x_nchw.shape
    D = C
    K = codebook.shape[0]
    HW = H * W

    # Free view of NCHW (review #1): no transpose, no extra HBM pass.  Lanes are
    # (h, w)-ordered within each batch element and the batch axis is the leading
    # grid axis, so the flat index ordering matches the reference's (n, h, w).
    x3 = x_nchw.reshape(N, D, HW).astype(jnp.float32)

    # Codebook prep hoisted out of the grid loop.  K padded to a sublane
    # multiple; padded rows get a huge half-norm so they never win the argmin.
    K_pad = max(8, _round_up(K, 8))
    cb = jnp.zeros((K_pad, D), jnp.float32).at[:K].set(codebook.astype(jnp.float32))
    row = jnp.arange(K_pad)[:, None]
    cb2h = jnp.where(row < K,
                     0.5 * jnp.sum(cb * cb, axis=1, keepdims=True),
                     jnp.float32(1e30))                          # (K_pad, 1)
    cbt = cb.T                                                   # (D, K_pad)

    # ---- tile sizing (review #2/#3/#4/#5) ----------------------------------
    vmem_cap = _vmem_capacity_bytes()
    hw_ceil = _round_up(HW, 128)
    # (a) bandwidth target: ~4 MiB of x per grid step
    t_bw = max(128, (4 * 1024 * 1024) // (4 * D))
    # (b) VMEM: double-buffered x/q/idx tiles + ~7 live (K_pad, t) f32 temps
    per_lane_bytes = 4 * (5 * D + 3 + 7 * K_pad)
    t_vmem = max(128, int(0.4 * vmem_cap) // per_lane_bytes)
    t_hw = max(128, (min(hw_ceil, t_bw, t_vmem) // 128) * 128)
    # (c) v7x megacore: a batch-1 call still needs >=2 parallel grid steps.
    if N == 1 and HW > 128:
        t_hw = min(t_hw, max(128, pl.cdiv(HW, 2 * 128) * 128))
    gm = pl.cdiv(HW, t_hw)
    HW_pad = gm * t_hw
    if HW_pad != HW:
        x3 = jnp.pad(x3, ((0, 0), (0, 0), (0, HW_pad - HW)))

    est = (4 * (2 * 2 * D * t_hw + 2 * t_hw + 2 * 128
                + 2 * (2 * K_pad * D + K_pad))
           + 4 * (7 * K_pad * t_hw + 2 * D * t_hw))
    vmem_limit = int(min(max(2 * est, 8 * 1024 * 1024), int(0.75 * vmem_cap)))

    kernel = functools.partial(_vq_kernel, hw_valid=HW, mask_tail=(HW_pad != HW))

    q3, idx3, sse_part = pl.pallas_call(
        kernel,
        out_shape=(
            jax.ShapeDtypeStruct((N, D, HW_pad), jnp.float32),    # quantized
            jax.ShapeDtypeStruct((N, 1, HW_pad), jnp.int32),      # indices
            jax.ShapeDtypeStruct((N, gm, 1, 128), jnp.float32),   # SSE partials
        ),
        grid_spec=pltpu.PrefetchScalarGridSpec(
            num_scalar_prefetch=0,
            grid=(N, gm),
            in_specs=[
                pl.BlockSpec((None, D, t_hw), lambda n, j: (n, 0, j)),
                pl.BlockSpec((K_pad, D), lambda n, j: (0, 0)),
                pl.BlockSpec((D, K_pad), lambda n, j: (0, 0)),
                pl.BlockSpec((K_pad, 1), lambda n, j: (0, 0)),
            ],
            out_specs=[
                pl.BlockSpec((None, D, t_hw), lambda n, j: (n, 0, j)),
                pl.BlockSpec((None, 1, t_hw), lambda n, j: (n, 0, j)),
                pl.BlockSpec((None, None, 1, 128), lambda n, j: (n, j, 0, 0)),
            ],
        ),
        compiler_params=pltpu.CompilerParams(
            dimension_semantics=("parallel", "parallel"),  # no cross-step state
            vmem_limit_bytes=vmem_limit,
        ),
    )(x3, cb, cbt, cb2h)

    sse = jnp.sum(sse_part[:, :, 0, 0])
    mse = sse / jnp.float32(N * HW * D)
    # encoding_loss == quantization_loss in forward value (detach affects grads only).
    commitment_loss = mse + commitment_cost * mse
    # TODO(synk): straight-through / detach gradient semantics need a custom VJP;
    # this kernel reproduces the forward values only.

    quantized = q3[:, :, :HW].reshape(N, C, H, W)                 # free when no pad
    encoding_indices = idx3[:, 0, :HW].reshape(N * HW)
    return quantized, commitment_loss, encoding_indices


def _reference(x_nchw, codebook, commitment_cost):
    x = jnp.transpose(x_nchw, (0, 2, 3, 1))
    flat = x.reshape(-1, x.shape[-1])
    d = jnp.sum((flat[:, None, :] - codebook[None, :, :]) ** 2, axis=-1)
    idx = jnp.argmin(d, axis=1)
    q = codebook[idx].reshape(x.shape)
    mse = jnp.mean((q - x) ** 2)
    loss = mse + commitment_cost * mse
    return jnp.transpose(q, (0, 3, 1, 2)), loss, idx


if __name__ == "__main__":
    num_embeddings = 16
    embedding_dim = 4          # == channels
    commitment_cost = 0.25

    key = jax.random.PRNGKey(0)
    kx, kc = jax.random.split(key)
    x = jax.random.normal(kx, (2, embedding_dim, 16, 16), dtype=jnp.float32)
    codebook = jax.random.uniform(
        kc, (num_embeddings, embedding_dim), dtype=jnp.float32,
        minval=-1.0 / num_embeddings, maxval=1.0 / num_embeddings)

    quantized, loss, indices = vector_quantizer(
        x, codebook, commitment_cost=commitment_cost)
    jax.block_until_ready((quantized, loss, indices))

    q_ref, loss_ref, idx_ref = _reference(x, codebook, commitment_cost)
    assert quantized.shape == (2, embedding_dim, 16, 16)
    assert indices.shape == (2 * 16 * 16,)
    assert jnp.allclose(quantized, q_ref, atol=1e-5)
    assert jnp.allclose(loss, loss_ref, atol=1e-5)
    assert jnp.array_equal(indices, idx_ref.astype(jnp.int32))

    print("KERNEL_OK")
</pallas_src>

<mosaic_0001>
module attributes {stable_mosaic.version = 11 : i64} {
  func.func @_vq_kernel(%arg0: i32, %arg1: i32, %arg2: memref<1x4x256xf32, #tpu.memory_space<vmem>>, %arg3: memref<16x4xf32, #tpu.memory_space<vmem>>, %arg4: memref<4x16xf32, #tpu.memory_space<vmem>>, %arg5: memref<16x1xf32, #tpu.memory_space<vmem>>, %arg6: memref<1x4x256xf32, #tpu.memory_space<vmem>>, %arg7: memref<1x1x256xi32, #tpu.memory_space<vmem>>, %arg8: memref<1x1x1x128xf32, #tpu.memory_space<vmem>>) attributes {dimension_semantics = [#tpu.dimension_semantics<parallel>, #tpu.dimension_semantics<parallel>], iteration_bounds = array<i64: 2, 1>, scalar_prefetch = 0 : i64, scratch_operands = 0 : i64, tpu.core_type = #tpu.core_type<tc>, window_params = [{transform_indices = @transform_0, window_bounds = array<i64: 1, 4, 256>}, {pipeline_mode = #tpu.pipeline_mode<synchronous>, transform_indices = @transform_1, window_bounds = array<i64: 16, 4>}, {pipeline_mode = #tpu.pipeline_mode<synchronous>, transform_indices = @transform_2, window_bounds = array<i64: 4, 16>}, {pipeline_mode = #tpu.pipeline_mode<synchronous>, transform_indices = @transform_3, window_bounds = array<i64: 16, 1>}, {transform_indices = @transform_4, window_bounds = array<i64: 1, 4, 256>}, {transform_indices = @transform_5, window_bounds = array<i64: 1, 1, 256>}, {transform_indices = @transform_6, window_bounds = array<i64: 1, 1, 1, 128>}]} {
    %c0 = arith.constant 0 : index
    %c0_0 = arith.constant 0 : index
    %c0_1 = arith.constant 0 : index
    %0 = vector.load %arg2[%c0, %c0_0, %c0_1] : memref<1x4x256xf32, #tpu.memory_space<vmem>>, vector<1x4x256xf32>
    %1 = vector.shape_cast %0 : vector<1x4x256xf32> to vector<4x256xf32>
    %c0_2 = arith.constant 0 : index
    %c0_3 = arith.constant 0 : index
    %2 = vector.load %arg3[%c0_2, %c0_3] : memref<16x4xf32, #tpu.memory_space<vmem>>, vector<16x4xf32>
    %c0_4 = arith.constant 0 : index
    %c0_5 = arith.constant 0 : index
    %3 = vector.load %arg4[%c0_4, %c0_5] : memref<4x16xf32, #tpu.memory_space<vmem>>, vector<4x16xf32>
    %c0_6 = arith.constant 0 : index
    %c0_7 = arith.constant 0 : index
    %4 = vector.load %arg5[%c0_6, %c0_7] : memref<16x1xf32, #tpu.memory_space<vmem>>, vector<16x1xf32>
    %cst = arith.constant dense<0.000000e+00> : vector<16x256xf32>
    %5 = tpu.matmul %2, %1, %cst {dimension_numbers = #tpu.dot_dimension_numbers<[1], [0], [0], [1], [0, 0, 1, 1], [], []>} : vector<16x4xf32>, vector<4x256xf32>, vector<16x256xf32> -> vector<16x256xf32>
    %6 = vector.broadcast %4 : vector<16x1xf32> to vector<16x256xf32>
    %7 = arith.subf %6, %5 : vector<16x256xf32>
    %8 = tpu.iota {dimensions = array<i32: 0>} : vector<16x256xi32>
    %cst_8 = arith.constant dense<0x7F800000> : vector<256xf32>
    %9 = vector.multi_reduction <minimumf>, %7, %cst_8 [0] : vector<16x256xf32> to vector<256xf32>
    %10 = vector.shape_cast %9 : vector<256xf32> to vector<1x256xf32>
    %11 = vector.broadcast %10 : vector<1x256xf32> to vector<16x256xf32>
    %12 = arith.cmpf oeq, %7, %11 : vector<16x256xf32>
    %c16_i32 = arith.constant 16 : i32
    %13 = vector.broadcast %c16_i32 : i32 to vector<16x256xi32>
    %14 = arith.select %12, %8, %13 : vector<16x256xi1>, vector<16x256xi32>
    %cst_9 = arith.constant dense<2147483647> : vector<256xi32>
    %15 = vector.multi_reduction <minsi>, %14, %cst_9 [0] : vector<16x256xi32> to vector<256xi32>
    %16 = vector.shape_cast %15 : vector<256xi32> to vector<1x256xi32>
    %17 = vector.broadcast %16 : vector<1x256xi32> to vector<16x256xi32>
    %18 = arith.cmpi eq, %8, %17 : vector<16x256xi32>
    %19 = arith.extui %18 : vector<16x256xi1> to vector<16x256xi32>
    %20 = arith.sitofp %19 : vector<16x256xi32> to vector<16x256xf32>
    %cst_10 = arith.constant dense<0.000000e+00> : vector<4x256xf32>
    %21 = tpu.matmul %3, %20, %cst_10 {dimension_numbers = #tpu.dot_dimension_numbers<[1], [0], [0], [1], [0, 0, 1, 1], [], []>} : vector<4x16xf32>, vector<16x256xf32>, vector<4x256xf32> -> vector<4x256xf32>
    %c0_11 = arith.constant 0 : index
    %c0_12 = arith.constant 0 : index
    %c0_13 = arith.constant 0 : index
    %22 = vector.load %arg6[%c0_11, %c0_12, %c0_13] : memref<1x4x256xf32, #tpu.memory_space<vmem>>, vector<1x4x256xf32>
    %23 = vector.shape_cast %22 : vector<1x4x256xf32> to vector<4x256xf32>
    %24 = vector.shape_cast %21 : vector<4x256xf32> to vector<1x4x256xf32>
    tpu.vector_store %arg6[%c0_11, %c0_12, %c0_13], %24 {strides = array<i32>} : memref<1x4x256xf32, #tpu.memory_space<vmem>>, vector<1x4x256xf32>,
    %c0_14 = arith.constant 0 : index
    %c0_15 = arith.constant 0 : index
    %c0_16 = arith.constant 0 : index
    %25 = vector.load %arg7[%c0_14, %c0_15, %c0_16] : memref<1x1x256xi32, #tpu.memory_space<vmem>>, vector<1x1x256xi32>
    %26 = vector.shape_cast %25 : vector<1x1x256xi32> to vector<1x256xi32>
    %27 = vector.shape_cast %16 : vector<1x256xi32> to vector<1x1x256xi32>
    tpu.vector_store %arg7[%c0_14, %c0_15, %c0_16], %27 {strides = array<i32>} : memref<1x1x256xi32, #tpu.memory_space<vmem>>, vector<1x1x256xi32>,
    %28 = arith.subf %21, %1 : vector<4x256xf32>
    %29 = arith.mulf %28, %28 : vector<4x256xf32>
    %cst_17 = arith.constant dense<0.000000e+00> : vector<256xf32>
    %30 = vector.multi_reduction <add>, %29, %cst_17 [0] : vector<4x256xf32> to vector<256xf32>
    %31 = vector.shape_cast %30 : vector<256xf32> to vector<1x256xf32>
    %32 = vector.shape_cast %31 : vector<1x256xf32> to vector<1x1x256xf32>
    %cst_18 = arith.constant dense<0.000000e+00> : vector<1xf32>
    %33 = vector.multi_reduction <add>, %32, %cst_18 [1, 2] : vector<1x1x256xf32> to vector<1xf32>
    %34 = vector.shape_cast %33 : vector<1xf32> to vector<1x1x1xf32>
    %35 = vector.extract %34[0, 0, 0] : f32 from vector<1x1x1xf32>
    %36 = vector.broadcast %35 : f32 to vector<1x128xf32>
    %c0_19 = arith.constant 0 : index
    %c0_20 = arith.constant 0 : index
    %c0_21 = arith.constant 0 : index
    %c0_22 = arith.constant 0 : index
    %37 = vector.load %arg8[%c0_19, %c0_20, %c0_21, %c0_22] : memref<1x1x1x128xf32, #tpu.memory_space<vmem>>, vector<1x1x1x128xf32>
    %38 = vector.shape_cast %37 : vector<1x1x1x128xf32> to vector<1x128xf32>
    %39 = vector.shape_cast %36 : vector<1x128xf32> to vector<1x1x1x128xf32>
    tpu.vector_store %arg8[%c0_19, %c0_20, %c0_21, %c0_22], %39 {strides = array<i32>} : memref<1x1x1x128xf32, #tpu.memory_space<vmem>>, vector<1x1x1x128xf32>,
    return
  }
  func.func @transform_0(%arg0: i32, %arg1: i32) -> (i32, i32, i32) {
    %c0_i32 = arith.constant 0 : i32
    %c0_i32_0 = arith.constant 0 : i32
    return %arg0, %c0_i32, %arg1 : i32, i32, i32
  }
  func.func @transform_1(%arg0: i32, %arg1: i32) -> (i32, i32) {
    %c0_i32 = arith.constant 0 : i32
    %c0_i32_0 = arith.constant 0 : i32
    %c0_i32_1 = arith.constant 0 : i32
    return %c0_i32, %c0_i32_0 : i32, i32
  }
  func.func @transform_2(%arg0: i32, %arg1: i32) -> (i32, i32) {
    %c0_i32 = arith.constant 0 : i32
    %c0_i32_0 = arith.constant 0 : i32
    %c0_i32_1 = arith.constant 0 : i32
    return %c0_i32, %c0_i32_0 : i32, i32
  }
  func.func @transform_3(%arg0: i32, %arg1: i32) -> (i32, i32) {
    %c0_i32 = arith.constant 0 : i32
    %c0_i32_0 = arith.constant 0 : i32
    %c0_i32_1 = arith.constant 0 : i32
    return %c0_i32, %c0_i32_0 : i32, i32
  }
  func.func @transform_4(%arg0: i32, %arg1: i32) -> (i32, i32, i32) {
    %c0_i32 = arith.constant 0 : i32
    %c0_i32_0 = arith.constant 0 : i32
    return %arg0, %c0_i32, %arg1 : i32, i32, i32
  }
  func.func @transform_5(%arg0: i32, %arg1: i32) -> (i32, i32, i32) {
    %c0_i32 = arith.constant 0 : i32
    %c0_i32_0 = arith.constant 0 : i32
    return %arg0, %c0_i32, %arg1 : i32, i32, i32
  }
  func.func @transform_6(%arg0: i32, %arg1: i32) -> (i32, i32, i32, i32) {
    %c0_i32 = arith.constant 0 : i32
    %c0_i32_0 = arith.constant 0 : i32
    %c0_i32_1 = arith.constant 0 : i32
    return %arg0, %arg1, %c0_i32, %c0_i32_0 : i32, i32, i32, i32
  }
}

</mosaic_0001>

<llo_original>
// kernel: vector_quantizer.1
$region0: #{vector_quantizer.1}
  #allocation0 [shape = 'u32[]', space=smem, size = 0x4, offset = 0x4, fixed_abs, tag = 'smem constant byte address 0x4 - core index']
  #allocation1 [shape = 'u32[144,128]{1,0:T(1,128)}', space=vmem, size = 0x12000, scoped, tag = 'internal scratch']
  %s0 = inlined_call_operand.vmem [shape: f32[2,4,256], index: 0, kind: input, shape index: {}]
  %s1 = inlined_call_operand.vmem [shape: f32[16,4], index: 1, kind: input, shape index: {}]
  %s2 = inlined_call_operand.vmem [shape: f32[4,16], index: 2, kind: input, shape index: {}]
  %s3 = inlined_call_operand.vmem [shape: f32[16,1], index: 3, kind: input, shape index: {}]
  %s4 = inlined_call_operand.vmem [shape: f32[2,4,256], index: 4, kind: output, shape index: {0}]
  %s5 = inlined_call_operand.hbm [shape: s32[2,1,256], index: 5, kind: output, shape index: {1}]
  %s6 = inlined_call_operand.vmem [shape: f32[2,1,1,128], index: 6, kind: output, shape index: {2}]
  %7 = xla_tuple %s4, %s5, %s6
  %s8 = sld [smem:[#allocation0]]
  $region65: #{vector_quantizer.1} parent=0
    _
  %s10 = ssub.s32 1, %s8
  %s11 = scalar_select 0, %s10, %s8
  $region1: #{vector_quantizer.1} parent=0
    #allocation2 [shape = 'u8[2048]{0}', space=vmem, size = 0x800, scoped, tag = 'output window, operand 1']
    #allocation3 [shape = 's32[2]{0}', space=sflag, size = 0x8, scoped, tag = 'scoped memory for vector_quantizer.1']
    %12 = vsyncpa [#allocation3], 0
    %s13 = scalar_lea.sflag [#allocation3], 1
    %14 = vsyncpa %s13, 0
    loop: start=0, step=1, limit=4
    $region2: #{vector_quantizer.1} parent=1 // loop_pre_header
      _
    $region3: #{vector_quantizer.1} parent=1 // loop_header
      %s16 = sphi 0, %s20
      %p17 = scmp.ge.s32.totalorder %s16, 4
      %s23 = sphi 0, %s35
      %s24 = sphi 0, %s31
      %s25 = sphi 0, %s23
      %s26 = sphi 0, %s24
      %s27 = sphi 0, %s25
      %s28 = sphi 0, %s26
      %s40 = sphi 0, %s42
      %s43 = sphi 0, %s40
      %s44 = sphi 0, %s43
      %s60 = sphi 0, %s44
      %s64 = sphi 0, %s64
      %s66 = sphi 0, %s64
      %s67 = sphi 0, %s66
      %s81 = sphi 0, %s67
      %s85 = sphi 0, %s85
      %s87 = sphi 0, %s85
      %s88 = sphi 0, %s87
      %s102 = sphi 0, %s88
      %s106 = sphi 0, %s106
      %s108 = sphi 0, %s106
      %s109 = sphi 0, %s108
      %s123 = sphi 0, %s109
      %s131 = sphi 0, %s133
      %s134 = sphi 0, %s131
      %s135 = sphi 0, %s134
      %s151 = sphi 0, %s135
      %s159 = sphi 0, %s161
      %s162 = sphi 0, %s159
      %s163 = sphi 0, %s162
      %s179 = sphi 0, %s163
      %s187 = sphi 0, %s189
      %s190 = sphi 0, %s187
      %s191 = sphi 0, %s190
      %s207 = sphi 0, %s191
    $region4: #{vector_quantizer.1} parent=1 // loop_header_branch
      %19 = sbr.rel (%p17) target = $region8
    $region5: #{vector_quantizer.1} parent=1 // loop_body
      %s21 = ssub.s32 %s16, 1
      %s22 = ssub.s32 %s16, 2
      %s29 = sadd.s32 1, %s24
      %p30 = scmp.ge.s32.totalorder %s29, 1
      %s31 = scalar_select %p30, 0, %s29
      %s32 = sadd.s32 1, %s23
      %s33 = scalar_select %p30, %s32, %s23
      %p34 = scmp.ge.s32.totalorder %s33, 2
      %s35 = scalar_select %p34, 0, %s33
      %s36 = ssub.s32 %s23, %s35
      %s37 = ssub.s32 %s24, %s31
      %s38 = sor.u32 %s36, %s37
      %p39 = scmp.eq.s32.totalorder %s38, 0
      %s41 = sadd.s32 %s40, 1
      %s42 = scalar_select %p39, %s40, %s41
      %p45 = pneg %p39
      %p46 = scmp.eq.s32.totalorder %s16, 1
      %p47 = por %p45, %p46
      %p48 = scmp.ne.s32.totalorder %s40, %s43
      %p49 = scmp.eq.s32.totalorder %s16, 0
      %p50 = por %p48, %p49
      %p51 = scmp.ne.s32.totalorder %s40, %s43
      %p52 = scmp.eq.s32.totalorder %s21, 1
      %p53 = por %p51, %p52
      %p54 = scmp.ne.s32.totalorder %s43, %s44
      %p55 = scmp.eq.s32.totalorder %s21, 0
      %p56 = por %p54, %p55
      %p57 = scmp.ne.s32.totalorder %s43, %s44
      %p58 = scmp.eq.s32.totalorder %s22, 1
      %p59 = por %p57, %p58
      %p61 = scmp.ne.s32.totalorder %s44, %s60
      %p62 = scmp.eq.s32.totalorder %s22, 0
      %p63 = por %p61, %p62
      %s65 = sadd.s32 %s64, 1
      %p68 = scmp.eq.s32.totalorder %s16, 1
      %p69 = scmp.ne.s32.totalorder %s64, %s66
      %p70 = scmp.eq.s32.totalorder %s16, 0
      %p71 = por %p69, %p70
      %p72 = scmp.ne.s32.totalorder %s64, %s66
      %p73 = scmp.eq.s32.totalorder %s21, 1
      %p74 = por %p72, %p73
      %p75 = scmp.ne.s32.totalorder %s66, %s67
      %p76 = scmp.eq.s32.totalorder %s21, 0
      %p77 = por %p75, %p76
      %p78 = scmp.ne.s32.totalorder %s66, %s67
      %p79 = scmp.eq.s32.totalorder %s22, 1
      %p80 = por %p78, %p79
      %p82 = scmp.ne.s32.totalorder %s67, %s81
      %p83 = scmp.eq.s32.totalorder %s22, 0
      %p84 = por %p82, %p83
      %s86 = sadd.s32 %s85, 1
      %p89 = scmp.eq.s32.totalorder %s16, 1
      %p90 = scmp.ne.s32.totalorder %s85, %s87
      %p91 = scmp.eq.s32.totalorder %s16, 0
      %p92 = por %p90, %p91
      %p93 = scmp.ne.s32.totalorder %s85, %s87
      %p94 = scmp.eq.s32.totalorder %s21, 1
      %p95 = por %p93, %p94
      %p96 = scmp.ne.s32.totalorder %s87, %s88
      %p97 = scmp.eq.s32.totalorder %s21, 0
      %p98 = por %p96, %p97
      %p99 = scmp.ne.s32.totalorder %s87, %s88
      %p100 = scmp.eq.s32.totalorder %s22, 1
      %p101 = por %p99, %p100
      %p103 = scmp.ne.s32.totalorder %s88, %s102
      %p104 = scmp.eq.s32.totalorder %s22, 0
      %p105 = por %p103, %p104
      %s107 = sadd.s32 %s106, 1
      %p110 = scmp.eq.s32.totalorder %s16, 1
      %p111 = scmp.ne.s32.totalorder %s106, %s108
      %p112 = scmp.eq.s32.totalorder %s16, 0
      %p113 = por %p111, %p112
      %p114 = scmp.ne.s32.totalorder %s106, %s108
      %p115 = scmp.eq.s32.totalorder %s21, 1
      %p116 = por %p114, %p115
      %p117 = scmp.ne.s32.totalorder %s108, %s109
      %p118 = scmp.eq.s32.totalorder %s21, 0
      %p119 = por %p117, %p118
      %p120 = scmp.ne.s32.totalorder %s108, %s109
      %p121 = scmp.eq.s32.totalorder %s22, 1
      %p122 = por %p120, %p121
      %p124 = scmp.ne.s32.totalorder %s109, %s123
      %p125 = scmp.eq.s32.totalorder %s22, 0
      %p126 = por %p124, %p125
      %s127 = ssub.s32 %s23, %s35
      %s128 = ssub.s32 %s24, %s31
      %s129 = sor.u32 %s127, %s128
      %p130 = scmp.eq.s32.totalorder %s129, 0
      %s132 = sadd.s32 %s131, 1
      %s133 = scalar_select %p130, %s131, %s132
      %p136 = pneg %p130
      %p137 = scmp.eq.s32.totalorder %s16, 1
      %p138 = por %p136, %p137
      %p139 = scmp.ne.s32.totalorder %s131, %s134
      %p140 = scmp.eq.s32.totalorder %s16, 0
      %p141 = por %p139, %p140
      %p142 = scmp.ne.s32.totalorder %s131, %s134
      %p143 = scmp.eq.s32.totalorder %s21, 1
      %p144 = por %p142, %p143
      %p145 = scmp.ne.s32.totalorder %s134, %s135
      %p146 = scmp.eq.s32.totalorder %s21, 0
      %p147 = por %p145, %p146
      %p148 = scmp.ne.s32.totalorder %s134, %s135
      %p149 = scmp.eq.s32.totalorder %s22, 1
      %p150 = por %p148, %p149
      %p152 = scmp.ne.s32.totalorder %s135, %s151
      %p153 = scmp.eq.s32.totalorder %s22, 0
      %p154 = por %p152, %p153
      %s155 = ssub.s32 %s23, %s35
      %s156 = ssub.s32 %s24, %s31
      %s157 = sor.u32 %s155, %s156
      %p158 = scmp.eq.s32.totalorder %s157, 0
      %s160 = sadd.s32 %s159, 1
      %s161 = scalar_select %p158, %s159, %s160
      %p164 = pneg %p158
      %p165 = scmp.eq.s32.totalorder %s16, 1
      %p166 = por %p164, %p165
      %p167 = scmp.ne.s32.totalorder %s159, %s162
      %p168 = scmp.eq.s32.totalorder %s16, 0
      %p169 = por %p167, %p168
      %p170 = scmp.ne.s32.totalorder %s159, %s162
      %p171 = scmp.eq.s32.totalorder %s21, 1
      %p172 = por %p170, %p171
      %p173 = scmp.ne.s32.totalorder %s162, %s163
      %p174 = scmp.eq.s32.totalorder %s21, 0
      %p175 = por %p173, %p174
      %p176 = scmp.ne.s32.totalorder %s162, %s163
      %p177 = scmp.eq.s32.totalorder %s22, 1
      %p178 = por %p176, %p177
      %p180 = scmp.ne.s32.totalorder %s163, %s179
      %p181 = scmp.eq.s32.totalorder %s22, 0
      %p182 = por %p180, %p181
      %s183 = ssub.s32 %s23, %s35
      %s184 = ssub.s32 %s24, %s31
      %s185 = sor.u32 %s183, %s184
      %p186 = scmp.eq.s32.totalorder %s185, 0
      %s188 = sadd.s32 %s187, 1
      %s189 = scalar_select %p186, %s187, %s188
      %p192 = pneg %p186
      %p193 = scmp.eq.s32.totalorder %s16, 1
      %p194 = por %p192, %p193
      %p195 = scmp.ne.s32.totalorder %s187, %s190
      %p196 = scmp.eq.s32.totalorder %s16, 0
      %p197 = por %p195, %p196
      %p198 = scmp.ne.s32.totalorder %s187, %s190
      %p199 = scmp.eq.s32.totalorder %s21, 1
      %p200 = por %p198, %p199
      %p201 = scmp.ne.s32.totalorder %s190, %s191
      %p202 = scmp.eq.s32.totalorder %s21, 0
      %p203 = por %p201, %p202
      %p204 = scmp.ne.s32.totalorder %s190, %s191
      %p205 = scmp.eq.s32.totalorder %s22, 1
      %p206 = por %p204, %p205
      %p208 = scmp.ne.s32.totalorder %s191, %s207
      %p209 = scmp.eq.s32.totalorder %s22, 0
      %p210 = por %p208, %p209
      %p211 = scmp.le.s32.totalorder 1, %s16
      %p212 = scmp.lt.s32.totalorder %s16, 3
      %p213 = pnand %p211, %p212
      %p214 = pneg %p213
      // Predicated region
      $region9: #{vector_quantizer.1} parent=5 // pred_check
        _
      $region10: #{vector_quantizer.1} parent=5 // pred_check_branch
        %216 = sbr.rel (%p213) target = $region12
      $region11: #{vector_quantizer.1} parent=5 // pred_region
        %s217 = ssub.s32 %s16, 1
        // Predicated region
        $region13: #{vector_quantizer.1} parent=11 // pred_check
          %p218 = pneg %p77
        $region14: #{vector_quantizer.1} parent=11 // pred_check_branch
          %220 = sbr.rel (%p218) target = $region16
        $region15: #{vector_quantizer.1} parent=11 // pred_region
          _
        $region16: #{vector_quantizer.1} parent=11 // pred_fallthru
          _
        // Predicated region
        $region17: #{vector_quantizer.1} parent=11 // pred_check
          %p221 = pneg %p98
        $region18: #{vector_quantizer.1} parent=11 // pred_check_branch
          %223 = sbr.rel (%p221) target = $region20
        $region19: #{vector_quantizer.1} parent=11 // pred_region
          _
        $region20: #{vector_quantizer.1} parent=11 // pred_fallthru
          _
        // Predicated region
        $region21: #{vector_quantizer.1} parent=11 // pred_check
          %p224 = pneg %p119
        $region22: #{vector_quantizer.1} parent=11 // pred_check_branch
          %226 = sbr.rel (%p224) target = $region24
        $region23: #{vector_quantizer.1} parent=11 // pred_region
          _
        $region24: #{vector_quantizer.1} parent=11 // pred_fallthru
          _
      $region12: #{vector_quantizer.1} parent=5 // pred_fallthru
        _
      %p227 = scmp.lt.s32.totalorder %s16, 2
      // Predicated region
      $region25: #{vector_quantizer.1} parent=5 // pred_check
        %p228 = pneg %p227
      $region26: #{vector_quantizer.1} parent=5 // pred_check_branch
        %230 = sbr.rel (%p228) target = $region28
      $region27: #{vector_quantizer.1} parent=5 // pred_region
        // Predicated region
        $region29: #{vector_quantizer.1} parent=27 // pred_check
          %p231 = pneg %p50
        $region30: #{vector_quantizer.1} parent=27 // pred_check_branch
          %233 = sbr.rel (%p231) target = $region32
        $region31: #{vector_quantizer.1} parent=27 // pred_region
          %s234 = smul.u32 2, %s24
          %p235 = scmp.lt.s32.totalorder %s23, 1
          %s236 = scalar_select %p235, %s23, 1
          %p237 = scmp.lt.s32.totalorder %s234, 1
          %s238 = scalar_select %p237, %s234, 1
          %s239 = smul.addr %s236, 2
          %s240 = sadd.s32 %s238, %s239
          %s241 = smul.addr %s240, 4
          %s242 = scalar_lea.vmem %s0, %s241
          %s243 = smul.u32 2, %s24
        $region32: #{vector_quantizer.1} parent=27 // pred_fallthru
          _
      $region28: #{vector_quantizer.1} parent=5 // pred_fallthru
        _
      %p244 = scmp.le.s32.totalorder 1, %s16
      %p245 = scmp.lt.s32.totalorder %s16, 3
      %p246 = pnand %p244, %p245
      %p247 = pneg %p246
      // Predicated region
      $region33: #{vector_quantizer.1} parent=5 // pred_check
        _
      $region34: #{vector_quantizer.1} parent=5 // pred_check_branch
        %249 = sbr.rel (%p246) target = $region36
      $region35: #{vector_quantizer.1} parent=5 // pred_region
        %s250 = ssub.s32 %s16, 1
        %s251 = smul.u32 2, %s26
        %p252 = scmp.lt.s32.totalorder %s25, 1
        %s253 = scalar_select %p252, %s25, 1
        %p254 = scmp.lt.s32.totalorder %s251, 1
        %s255 = scalar_select %p254, %s251, 1
        %s256 = smul.addr %s253, 2
        %s257 = sadd.s32 %s255, %s256
        %s258 = smul.addr %s257, 4
        %s259 = scalar_lea.vmem %s0, %s258
        %p260 = pneg %p56
        %p261 = pneg %p53
        %p262 = pneg %p77
        %p263 = pneg %p74
        %p264 = pneg %p98
        %p265 = pneg %p95
        %p266 = pneg %p119
        %p267 = pneg %p116
        %p268 = pneg %p147
        %p269 = pneg %p144
        %s270 = smul.u32 2, %s26
        %p271 = scmp.lt.s32.totalorder %s25, 1
        %s272 = scalar_select %p271, %s25, 1
        %p273 = scmp.lt.s32.totalorder %s270, 1
        %s274 = scalar_select %p273, %s270, 1
        %s275 = smul.addr %s272, 2
        %s276 = sadd.s32 %s274, %s275
        %s277 = smul.addr %s276, 4
        %s278 = scalar_lea.vmem %s4, %s277
        %p279 = pneg %p175
        %p280 = pneg %p172
        %s281 = sand.u32 %s162, 1
        %s282 = scalar_lea.sflag [#allocation3], %s281
        %s283 = sand.u32 %s162, 1
        %s284 = smul.addr %s283, 2
        %s285 = scalar_lea.vmem [#allocation2], %s284
        %p286 = pneg %p203
        %p287 = pneg %p200
        %p288 = scmp.lt.s32.totalorder %s25, 1
        %s289 = scalar_select %p288, %s25, 1
        %p290 = scmp.lt.s32.totalorder %s26, 0
        %s291 = scalar_select %p290, %s26, 0
        %s292 = sadd.s32 %s291, %s289
        %s293 = scalar_lea.vmem %s6, %s292
        %s294 = smul.u32 2, %s26
        %p295 = scmp.lt.s32.totalorder %s25, 1
        %s296 = scalar_select %p295, %s25, 1
        %p297 = scmp.lt.s32.totalorder %s294, 1
        %s298 = scalar_select %p297, %s294, 1
        %s299 = smul.addr %s296, 2
        %s300 = sadd.s32 %s298, %s299
        %s301 = smul.addr %s300, 4
        %s302 = scalar_lea.vmem %s0, %s301
        %s303 = smul.u32 2, %s26
        %s304 = smul.u32 2, %s26
        %p305 = scmp.lt.s32.totalorder %s25, 1
        %s306 = scalar_select %p305, %s25, 1
        %p307 = scmp.lt.s32.totalorder %s304, 1
        %s308 = scalar_select %p307, %s304, 1
        %s309 = smul.addr %s306, 2
        %s310 = sadd.s32 %s308, %s309
        %s311 = smul.addr %s310, 4
        %s312 = scalar_lea.vmem %s4, %s311
        %s313 = smul.u32 2, %s26
        %s314 = smul.u32 2, %s26
        %p315 = scmp.lt.s32.totalorder %s25, 1
        %s316 = scalar_select %p315, %s25, 1
        %p317 = scmp.lt.s32.totalorder %s26, 0
        %s318 = scalar_select %p317, %s26, 0
        %s319 = sadd.s32 %s318, %s316
        %s320 = scalar_lea.vmem %s6, %s319
        %v321 = vld [vmem:[%s302] sm:$0xff]
        %v322 = vld [vmem:[%s1] sm:$0xff]
        %v323 = vld [vmem:[%s1 + $0x8] sm:$0xff]
        %v324 = vld [vmem:[%s2] sm:$0xf]
        %v325 = vld [vmem:[%s3] sm:$0xff]
        %v326 = vld [vmem:[%s3 + $0x8] sm:$0xff]
        %v328 = vcombine.high %v321, %v321
        %vm329 = vcmask 31744
        %v331 = vsel %vm329, %v322, 0
        %v334 = vsel %vm329, %v323, 0
        %vm336 = vcmask 1043456
        %v337 = vsel %vm336, %v321, 0
        %v339 = vsel %vm336, %v328, 0
        %341 = vmatprep.subr.mxu0 %v339
        %342 = vmatpush1.msra.mxu0 %v337
        %343 = vmatprep.subr.mxu0 0.0
        %344 = vmatpush1.msra.mxu0 0.0
        %345 = vmatprep.subr.mxu0 0.0
        %346 = vmatpush1.msra.mxu0 0.0
        %347 = vmatprep.subr.mxu0 0.0
        %348 = vmatpush1.msra.mxu0 0.0
        %349 = vmatprep.subr.mxu0 0.0
        %350 = vmatpush1.msra.mxu0 0.0
        %351 = vmatprep.subr.mxu0 0.0
        %352 = vmatpush1.msra.mxu0 0.0
        %353 = vmatprep.subr.mxu0 0.0
        %354 = vmatpush1.msra.mxu0 0.0
        %355 = vmatprep.subr.mxu0 0.0
        %356 = vmatpush1.msra.mxu0 0.0
        %357 = vmatprep.subr.mxu0 0.0
        %358 = vmatpush1.msra.mxu0 0.0
        %359 = vmatprep.subr.mxu0 0.0
        %360 = vmatpush1.msra.mxu0 0.0
        %361 = vmatprep.subr.mxu0 0.0
        %362 = vmatpush1.msra.mxu0 0.0
        %363 = vmatprep.subr.mxu0 0.0
        %364 = vmatpush1.msra.mxu0 0.0
        %365 = vmatprep.subr.mxu0 0.0
        %366 = vmatpush1.msra.mxu0 0.0
        %367 = vmatprep.subr.mxu0 0.0
        %368 = vmatpush1.msra.mxu0 0.0
        %369 = vmatprep.subr.mxu0 0.0
        %370 = vmatpush1.msra.mxu0 0.0
        %371 = vmatprep.subr.mxu0 0.0
        %372 = vmatpush1.msra.mxu0 0.0
        %373 = vmatprep.subr.mxu0 0.0
        %374 = vmatpush1.msra.mxu0 0.0
        %375 = vmatprep.subr.mxu0 0.0
        %376 = vmatpush1.msra.mxu0 0.0
        %377 = vmatprep.subr.mxu0 0.0
        %378 = vmatpush1.msra.mxu0 0.0
        %379 = vmatprep.subr.mxu0 0.0
        %380 = vmatpush1.msra.mxu0 0.0
        %381 = vmatprep.subr.mxu0 0.0
        %382 = vmatpush1.msra.mxu0 0.0
        %383 = vmatprep.subr.mxu0 0.0
        %384 = vmatpush1.msra.mxu0 0.0
        %385 = vmatprep.subr.mxu0 0.0
        %386 = vmatpush1.msra.mxu0 0.0
        %387 = vmatprep.subr.mxu0 0.0
        %388 = vmatpush1.msra.mxu0 0.0
        %389 = vmatprep.subr.mxu0 0.0
        %390 = vmatpush1.msra.mxu0 0.0
        %391 = vmatprep.subr.mxu0 0.0
        %392 = vmatpush1.msra.mxu0 0.0
        %393 = vmatprep.subr.mxu0 0.0
        %394 = vmatpush1.msra.mxu0 0.0
        %395 = vmatprep.subr.mxu0 0.0
        %396 = vmatpush1.msra.mxu0 0.0
        %397 = vmatprep.subr.mxu0 0.0
        %398 = vmatpush1.msra.mxu0 0.0
        %399 = vmatprep.subr.mxu0 0.0
        %400 = vmatpush1.msra.mxu0 0.0
        %401 = vmatprep.subr.mxu0 0.0
        %402 = vmatpush1.msra.mxu0 0.0
        %403 = vmatprep.subr.mxu0 0.0
        %404 = vmatpush1.msra.mxu0 0.0
        %405 = vmatprep.mubr.f32.mxu0 0.0
        %406 = vmatmul.mubr.f32.gmra.mrb[0].mxu0 %v331
        %v407 = vpop.f32.mrb[0].mxu0
        %v408 = vadd.f32 0.0, %v407
        %v409 = vpop.f32.mrb[0].mxu0
        %v410 = vadd.f32 0.0, %v409
        %411 = vmatprep.mubr.f32.mxu0 0.0
        %412 = vmatmul.mubr.f32.gmra.mrb[0].mxu0 %v334
        %v413 = vpop.f32.mrb[0].mxu0
        %v414 = vadd.f32 0.0, %v413
        %v415 = vpop.f32.mrb[0].mxu0
        %v416 = vadd.f32 0.0, %v415
        %417 = vdwg.mxu0
        %419 = vset.pattern.permute.xlu0 0
        %420 = vperm.xlu0 %419, %v325
        %v421 = vpop.permute.xlu0 %420
        %424 = vset.pattern.permute.xlu0 0
        %425 = vperm.xlu0 %424, %v326
        %v426 = vpop.permute.xlu0 %425
        %v428 = vsub.f32 %v421, %v408
        %v429 = vsub.f32 %v421, %v410
        %v430 = vsub.f32 %v426, %v414
        %v431 = vsub.f32 %v426, %v416
        %v432 = vlaneseq
        %v433 = vshrl.u32 %v432, 7
        %v434 = vadd.s32 %v433, 8
        %v435 = vmin.f32 %v428, %v430
        %v436 = vrot.slane %v435, 4
        %v437 = vmin.f32 %v435, %v436
        %v438 = vrot.slane %v437, 2
        %v439 = vmin.f32 %v437, %v438
        %v440 = vrot.slane %v439, 1
        %v441 = vmin.f32 %v439, %v440
        %v442 = vmin.f32 %v429, %v431
        %v443 = vrot.slane %v442, 4
        %v444 = vmin.f32 %v442, %v443
        %v445 = vrot.slane %v444, 2
        %v446 = vmin.f32 %v444, %v445
        %v447 = vrot.slane %v446, 1
        %v448 = vmin.f32 %v446, %v447
        %vm449 = vcmp.eq.f32.partialorder %v428, %v441
        %vm450 = vcmp.eq.f32.partialorder %v429, %v448
        %vm451 = vcmp.eq.f32.partialorder %v430, %v441
        %vm452 = vcmp.eq.f32.partialorder %v431, %v448
        %v453 = vsel %vm449, %v433, 16
        %v454 = vsel %vm450, %v433, 16
        %v455 = vsel %vm451, %v434, 16
        %v456 = vsel %vm452, %v434, 16
        %vm457 = vcmp.lt.s32.totalorder %v453, %v455
        %v458 = vsel %vm457, %v453, %v455
        %v459 = vrot.slane %v458, 4
        %vm460 = vcmp.lt.s32.totalorder %v458, %v459
        %v461 = vsel %vm460, %v458, %v459
        %v462 = vrot.slane %v461, 2
        %vm463 = vcmp.lt.s32.totalorder %v461, %v462
        %v464 = vsel %vm463, %v461, %v462
        %v465 = vrot.slane %v464, 1
        %vm466 = vcmp.lt.s32.totalorder %v464, %v465
        %v467 = vsel %vm466, %v464, %v465
        %vm468 = vcmp.lt.s32.totalorder %v454, %v456
        %v469 = vsel %vm468, %v454, %v456
        %v470 = vrot.slane %v469, 4
        %vm471 = vcmp.lt.s32.totalorder %v469, %v470
        %v472 = vsel %vm471, %v469, %v470
        %v473 = vrot.slane %v472, 2
        %vm474 = vcmp.lt.s32.totalorder %v472, %v473
        %v475 = vsel %vm474, %v472, %v473
        %v476 = vrot.slane %v475, 1
        %vm477 = vcmp.lt.s32.totalorder %v475, %v476
        %v478 = vsel %vm477, %v475, %v476
        %vm479 = vcmp.eq.s32.totalorder %v433, %v467
        %vm480 = vcmp.eq.s32.totalorder %v433, %v478
        %vm481 = vcmp.eq.s32.totalorder %v434, %v467
        %vm482 = vcmp.eq.s32.totalorder %v434, %v478
        %v483 = vsel %vm479, 1, 0
        %v484 = vsel %vm480, 1, 0
        %v485 = vsel %vm481, 1, 0
        %v486 = vsel %vm482, 1, 0
        %v487 = vcvt.s32.f32 %v483
        %v488 = vcvt.s32.f32 %v484
        %v489 = vcvt.s32.f32 %v485
        %v490 = vcvt.s32.f32 %v486
        %vm491 = vcmask 130048
        %v493 = vsel %vm491, %v324, 0
        %495 = vmatprep.subr.mxu0 %v488
        %496 = vmatpush1.msra.mxu0 %v487
        %497 = vmatprep.subr.mxu0 %v490
        %498 = vmatpush1.msra.mxu0 %v489
        %499 = vmatprep.subr.mxu0 0.0
        %500 = vmatpush1.msra.mxu0 0.0
        %501 = vmatprep.subr.mxu0 0.0
        %502 = vmatpush1.msra.mxu0 0.0
        %503 = vmatprep.subr.mxu0 0.0
        %504 = vmatpush1.msra.mxu0 0.0
        %505 = vmatprep.subr.mxu0 0.0
        %506 = vmatpush1.msra.mxu0 0.0
        %507 = vmatprep.subr.mxu0 0.0
        %508 = vmatpush1.msra.mxu0 0.0
        %509 = vmatprep.subr.mxu0 0.0
        %510 = vmatpush1.msra.mxu0 0.0
        %511 = vmatprep.subr.mxu0 0.0
        %512 = vmatpush1.msra.mxu0 0.0
        %513 = vmatprep.subr.mxu0 0.0
        %514 = vmatpush1.msra.mxu0 0.0
        %515 = vmatprep.subr.mxu0 0.0
        %516 = vmatpush1.msra.mxu0 0.0
        %517 = vmatprep.subr.mxu0 0.0
        %518 = vmatpush1.msra.mxu0 0.0
        %519 = vmatprep.subr.mxu0 0.0
        %520 = vmatpush1.msra.mxu0 0.0
        %521 = vmatprep.subr.mxu0 0.0
        %522 = vmatpush1.msra.mxu0 0.0
        %523 = vmatprep.subr.mxu0 0.0
        %524 = vmatpush1.msra.mxu0 0.0
        %525 = vmatprep.subr.mxu0 0.0
        %526 = vmatpush1.msra.mxu0 0.0
        %527 = vmatprep.subr.mxu0 0.0
        %528 = vmatpush1.msra.mxu0 0.0
        %529 = vmatprep.subr.mxu0 0.0
        %530 = vmatpush1.msra.mxu0 0.0
        %531 = vmatprep.subr.mxu0 0.0
        %532 = vmatpush1.msra.mxu0 0.0
        %533 = vmatprep.subr.mxu0 0.0
        %534 = vmatpush1.msra.mxu0 0.0
        %535 = vmatprep.subr.mxu0 0.0
        %536 = vmatpush1.msra.mxu0 0.0
        %537 = vmatprep.subr.mxu0 0.0
        %538 = vmatpush1.msra.mxu0 0.0
        %539 = vmatprep.subr.mxu0 0.0
        %540 = vmatpush1.msra.mxu0 0.0
        %541 = vmatprep.subr.mxu0 0.0
        %542 = vmatpush1.msra.mxu0 0.0
        %543 = vmatprep.subr.mxu0 0.0
        %544 = vmatpush1.msra.mxu0 0.0
        %545 = vmatprep.subr.mxu0 0.0
        %546 = vmatpush1.msra.mxu0 0.0
        %547 = vmatprep.subr.mxu0 0.0
        %548 = vmatpush1.msra.mxu0 0.0
        %549 = vmatprep.subr.mxu0 0.0
        %550 = vmatpush1.msra.mxu0 0.0
        %551 = vmatprep.subr.mxu0 0.0
        %552 = vmatpush1.msra.mxu0 0.0
        %553 = vmatprep.subr.mxu0 0.0
        %554 = vmatpush1.msra.mxu0 0.0
        %555 = vmatprep.subr.mxu0 0.0
        %556 = vmatpush1.msra.mxu0 0.0
        %557 = vmatprep.subr.mxu0 0.0
        %558 = vmatpush1.msra.mxu0 0.0
        %559 = vmatprep.mubr.f32.mxu0 0.0
        %560 = vmatmul.mubr.f32.gmra.mrb[0].mxu0 %v493
        %v561 = vpop.f32.mrb[0].mxu0
        %v562 = vadd.f32 0.0, %v561
        %v563 = vpop.f32.mrb[0].mxu0
        %v564 = vadd.f32 0.0, %v563
        %565 = vdwg.mxu0
        %v568 = vcombine.low %v562, %v564
        %570 = vst [vmem:[%s312] sm:$0xff] %v568
        %v571 = vcombine.low %v467, %v478
        %v573 = vunpack.c.l.s4 1966171168
        %v574 = vunpack.c.0.s8 %v573
        %v575 = vlaneseq
        %v576 = vshrl.u32 %v575, 7
        %v577 = vsub.s32 %v574, %v576
        %v578 = vrot.slane %v571, %v577
        %v580 = vunpack.c.l.s4 1966171168
        %v581 = vunpack.c.0.s8 %v580
        %v582 = vlaneseq
        %v583 = vshrl.u32 %v582, 7
        %v584 = vsub.s32 %v581, %v583
        %v585 = vrot.slane %v578, %v584
        %v586 = vlaneseq
        %vm587 = vcmp.ge.s32.totalorder %v586, 0
        %vm588 = vcmp.lt.s32.totalorder %v586, 256
        %vm589 = vmand %vm587, %vm588
        %590 = vst.msk [vmem:[%s285] sm:$0x3] %vm589, %v585
        %v592 = vsub.f32 %v562, %v321
        %v593 = vsub.f32 %v564, %v328
        %v594 = vmul.f32 %v592, %v592
        %v595 = vmul.f32 %v593, %v593
        %v596 = vsel %vm336, %v594, 0.0
        %v597 = vrot.slane %v596, 4
        %v598 = vadd.f32 %v596, %v597
        %v599 = vrot.slane %v598, 2
        %v600 = vadd.f32 %v598, %v599
        %v601 = vrot.slane %v600, 1
        %v602 = vadd.f32 %v600, %v601
        %v603 = vsel %vm336, %v595, 0.0
        %v604 = vrot.slane %v603, 4
        %v605 = vadd.f32 %v603, %v604
        %v606 = vrot.slane %v605, 2
        %v607 = vadd.f32 %v605, %v606
        %v608 = vrot.slane %v607, 1
        %v609 = vadd.f32 %v607, %v608
        %vm610 = vcmask 1040384
        %v611 = vsel %vm610, %v602, 0.0
        %v612 = vsel %vm610, %v609, 0.0
        %v613 = vadd.f32 %v611, %v612
        %614 = vadd.xlane.f32.xlu0 %v613
        %v615 = vpop.xlane.xlu0 %614
        %v616 = vrot.slane %v615, 4
        %v617 = vadd.f32 %v615, %v616
        %v618 = vrot.slane %v617, 2
        %v619 = vadd.f32 %v617, %v618
        %v620 = vrot.slane %v619, 1
        %v621 = vadd.f32 %v619, %v620
        %s622 = vtos %v621
        %v623 = vstv %s622
        %624 = vst [vmem:[%s320] sm:$0x1] %v623
        %s625 = smul.u32 2, %s26
        %p626 = scmp.lt.s32.totalorder %s25, 1
        %s627 = scalar_select %p626, %s25, 1
        %p628 = scmp.lt.s32.totalorder %s625, 1
        %s629 = scalar_select %p628, %s625, 1
        %s630 = smul.addr %s627, 2
        %s631 = sadd.s32 %s629, %s630
        %s632 = smul.addr %s631, 4
        %s633 = scalar_lea.vmem %s4, %s632
        %s634 = sand.u32 %s162, 1
        %s635 = scalar_lea.sflag [#allocation3], %s634
        %s636 = sand.u32 %s162, 1
        %s637 = smul.addr %s636, 2
        %s638 = scalar_lea.vmem [#allocation2], %s637
        %p639 = scmp.lt.s32.totalorder %s25, 1
        %s640 = scalar_select %p639, %s25, 1
        %p641 = scmp.lt.s32.totalorder %s26, 0
        %s642 = scalar_select %p641, %s26, 0
        %s643 = sadd.s32 %s642, %s640
        %s644 = scalar_lea.vmem %s6, %s643
        // Predicated region
        $region37: #{vector_quantizer.1} parent=35 // pred_check
          %p645 = pneg %p144
        $region38: #{vector_quantizer.1} parent=35 // pred_check_branch
          %647 = sbr.rel (%p645) target = $region40
        $region39: #{vector_quantizer.1} parent=35 // pred_region
          %s648 = smul.u32 2, %s26
        $region40: #{vector_quantizer.1} parent=35 // pred_fallthru
          _
        // Predicated region
        $region41: #{vector_quantizer.1} parent=35 // pred_check
          %p649 = pneg %p172
        $region42: #{vector_quantizer.1} parent=35 // pred_check_branch
          %651 = sbr.rel (%p649) target = $region44
        $region43: #{vector_quantizer.1} parent=35 // pred_region
          %s652 = smul.u32 2, %s26
          %s654 = ssub.s32 32, 32
          %655 = vsyncadd %s635, %s654
          %s656 = smul.addr %s25, 2
          %s657 = sadd.s32 %s652, %s656
          %s658 = smul.addr %s657, 16
          %s659 = scalar_lea.hbm %s5, %s658
          %s661 = sshll.u32 %s638, 4
          %s662 = int_to_ptr.vmem [resolvable:$true] %s661
          %664 = dma.vmem_to_hbm [thread:$0]  %s662, 32, %s659, %s635
        $region44: #{vector_quantizer.1} parent=35 // pred_fallthru
          _
        // Predicated region
        $region45: #{vector_quantizer.1} parent=35 // pred_check
          %p665 = pneg %p200
        $region46: #{vector_quantizer.1} parent=35 // pred_check_branch
          %667 = sbr.rel (%p665) target = $region48
        $region47: #{vector_quantizer.1} parent=35 // pred_region
          _
        $region48: #{vector_quantizer.1} parent=35 // pred_fallthru
          _
      $region36: #{vector_quantizer.1} parent=5 // pred_fallthru
        _
      %p668 = scmp.le.s32.totalorder 2, %s16
      // Predicated region
      $region49: #{vector_quantizer.1} parent=5 // pred_check
        %p669 = pneg %p668
      $region50: #{vector_quantizer.1} parent=5 // pred_check_branch
        %671 = sbr.rel (%p669) target = $region52
      $region51: #{vector_quantizer.1} parent=5 // pred_region
        %s672 = ssub.s32 %s16, 2
        // Predicated region
        $region53: #{vector_quantizer.1} parent=51 // pred_check
          %p673 = pneg %p150
        $region54: #{vector_quantizer.1} parent=51 // pred_check_branch
          %675 = sbr.rel (%p673) target = $region56
        $region55: #{vector_quantizer.1} parent=51 // pred_region
          %s676 = smul.u32 2, %s28
          %p677 = scmp.lt.s32.totalorder %s27, 1
          %s678 = scalar_select %p677, %s27, 1
          %p679 = scmp.lt.s32.totalorder %s676, 1
          %s680 = scalar_select %p679, %s676, 1
          %s681 = smul.addr %s678, 2
          %s682 = sadd.s32 %s680, %s681
          %s683 = smul.addr %s682, 4
          %s684 = scalar_lea.vmem %s4, %s683
        $region56: #{vector_quantizer.1} parent=51 // pred_fallthru
          _
        // Predicated region
        $region57: #{vector_quantizer.1} parent=51 // pred_check
          %p685 = pneg %p178
        $region58: #{vector_quantizer.1} parent=51 // pred_check_branch
          %687 = sbr.rel (%p685) target = $region60
        $region59: #{vector_quantizer.1} parent=51 // pred_region
          %s688 = sand.u32 %s163, 1
          %s689 = scalar_lea.sflag [#allocation3], %s688
          %s690 = sand.u32 %s163, 1
          %s691 = smul.addr %s690, 2
          %s692 = scalar_lea.vmem [#allocation2], %s691
          %693 = dma.done %s689, 32
        $region60: #{vector_quantizer.1} parent=51 // pred_fallthru
          _
        // Predicated region
        $region61: #{vector_quantizer.1} parent=51 // pred_check
          %p694 = pneg %p206
        $region62: #{vector_quantizer.1} parent=51 // pred_check_branch
          %696 = sbr.rel (%p694) target = $region64
        $region63: #{vector_quantizer.1} parent=51 // pred_region
          %p697 = scmp.lt.s32.totalorder %s27, 1
          %s698 = scalar_select %p697, %s27, 1
          %p699 = scmp.lt.s32.totalorder %s28, 0
          %s700 = scalar_select %p699, %s28, 0
          %s701 = sadd.s32 %s700, %s698
          %s702 = scalar_lea.vmem %s6, %s701
        $region64: #{vector_quantizer.1} parent=51 // pred_fallthru
          _
      $region52: #{vector_quantizer.1} parent=5 // pred_fallthru
        _
    $region6: #{vector_quantizer.1} parent=1 // loop_footer
      %s20 = sadd.s32 1, %s16
    $region7: #{vector_quantizer.1} parent=1 // loop_footer_branch
      %15 = sbr.rel target = $region3
    $region8: #{vector_quantizer.1} parent=1 // loop_exit
      _
    %703 = vsyncpa [#allocation3], 1
    %s704 = scalar_lea.sflag [#allocation3], 1
    %705 = vsyncpa %s704, 1

</llo_original>
